<compile_context>
chip_gen: v6e
topology: v6e:2x2x1
jax: 0.10.0
libtpu: 0.0.40
codegen_flags: <defaults>
</compile_context>

<pallas_src>
import jax
import jax.numpy as jnp
import numpy as np
from jax import lax
from jax.experimental import pallas as pl
from jax.experimental.pallas import tpu as pltpu

EPS = 1e-5


# ----------------------------------------------------------------------------- kernel
def _make_temporal_block_kernel(kernel_size, dilation, has_downsample, carry_history):
    K, D = kernel_size, dilation
    P = (K - 1) * D

    def kernel(*refs):
        if has_downsample:
            (x_ref, w1_ref, b1_ref, w2_ref, b2_ref, wr_ref, br_ref,
             o_ref, xbuf, hbuf) = refs
        else:
            (x_ref, w1_ref, b1_ref, w2_ref, b2_ref,
             o_ref, xbuf, hbuf) = refs
            wr_ref = br_ref = None

        x = x_ref[0]                                 # (Cin, Tt)  channels x time-tile
        Tt = x.shape[1]
        cdt = xbuf.dtype                             # bf16 compute dtype (or f32)
        w1 = w1_ref[...]                             # (K, Cout, Cin), BN1 folded in
        w2 = w2_ref[...]                             # (K, Cout, Cout), BN2 folded in

        # Zero the causal history at the first time tile of every batch element.
        if P > 0:
            @pl.when(pl.program_id(1) == 0)
            def _init():
                xbuf[:, :P] = jnp.zeros((xbuf.shape[0], P), xbuf.dtype)
                hbuf[:, :P] = jnp.zeros((hbuf.shape[0], P), hbuf.dtype)

        # ---- conv1 (folded BN1) + ReLU ---------------------------------------
        xb = x.astype(cdt)                           # bf16 MXU operand
        if P > 0:
            xbuf[:, P:] = xb                         # stage tile after its P-col history
        acc = jnp.dot(w1[K - 1], xb, preferred_element_type=jnp.float32)
        for j in range(K - 1):                       # static unrolled dilated taps (MXU)
            acc = acc + jnp.dot(w1[j], xbuf[:, j * D:j * D + Tt],
                                preferred_element_type=jnp.float32)
        h = jnp.maximum(acc + b1_ref[...], 0.0)      # (Cout, Tt), f32

        # ---- conv2 (folded BN2) + ReLU ---------------------------------------
        hb = h.astype(cdt)
        if P > 0:
            hbuf[:, P:] = hb
        acc2 = jnp.dot(w2[K - 1], hb, preferred_element_type=jnp.float32)
        for j in range(K - 1):
            acc2 = acc2 + jnp.dot(w2[j], hbuf[:, j * D:j * D + Tt],
                                  preferred_element_type=jnp.float32)
        y = jnp.maximum(acc2 + b2_ref[...], 0.0)     # (Cout, Tt), f32

        # ---- residual (1x1 conv or identity) + final ReLU (f32 epilogue) ------
        if has_downsample:
            res = jnp.dot(wr_ref[...], xb, preferred_element_type=jnp.float32) + br_ref[...]
        else:
            res = x
        o_ref[0] = jnp.maximum(y + res, 0.0).astype(o_ref.dtype)

        # ---- carry the last P columns to the next time tile -------------------
        # Guarded off on the last tile so undefined padded columns of a partial
        # tail can never leak, regardless of grid ordering / init gating.
        if P > 0 and carry_history:
            @pl.when(pl.program_id(1) + 1 < pl.num_programs(1))
            def _carry():
                xbuf[:, :P] = xb[:, Tt - P:]
                hbuf[:, :P] = hb[:, Tt - P:]

    return kernel


# ----------------------------------------------------------------------------- wrapper
def _round_up(x, m):
    return ((x + m - 1) // m) * m


def _pick_time_tile(T, P, cin, cout):
    """Lane-dense (multiple-of-128) time tile.

    Sized so each live (C, Tt) f32 intermediate stays around <=32 vregs (spill
    pressure) and resident VMEM stays small enough for v7x (64 MiB) as well;
    clamped to [512, 2048] columns so the ~0.35 us per-grid-step overhead is
    amortized.  Always >= P so one tile of history suffices for the causal carry.
    """
    cmax = max(cin, cout, 1)
    target = max(512, min(2048, (32 * 1024) // cmax))
    target = _round_up(max(target, P, 1), 128)
    if T > target:
        return target
    # Short sequence: prefer lane-dense tiles with a masked tail over one fully
    # unaligned block when T is large enough; else a single full-extent block.
    tile = (T // 128) * 128
    if T % 128 != 0 and tile >= max(P, 128):
        return tile
    return T


def temporal_block_forward(x_nct, params, kernel_size, dilation,
                           compute_dtype=jnp.bfloat16):
    """x_nct: (N, Cin, T) float -> (N, Cout, T) float32.  PyTorch NCT layout in/out."""
    N, Cin, T = x_nct.shape
    Cout = params["w1"].shape[0]
    K = kernel_size
    P = (K - 1) * dilation

    if x_nct.dtype not in (jnp.float32, jnp.bfloat16):
        x_nct = x_nct.astype(jnp.float32)

    # Fold eval-mode BatchNorm into conv weight/bias:
    #   bn(conv(x) + b) = conv_{w * s}(x) + ((b - mu) * s + beta),  s = g * rsqrt(var + eps)
    # Weights are cast to the MXU compute dtype (bf16); biases stay f32.
    def fold_bn(w_oik, b, g, beta, mu, var):
        s = (g * lax.rsqrt(var.astype(jnp.float32) + EPS)).astype(jnp.float32)   # (Cout,)
        w_koi = jnp.transpose(w_oik, (2, 0, 1)).astype(jnp.float32) * s[None, :, None]
        b_f = ((b - mu) * s + beta).astype(jnp.float32)[:, None]                 # (Cout, 1)
        return w_koi.astype(compute_dtype), b_f

    w1, b1 = fold_bn(params["w1"], params["b1"], params["g1"], params["beta1"],
                     params["mu1"], params["var1"])
    w2, b2 = fold_bn(params["w2"], params["b2"], params["g2"], params["beta2"],
                     params["mu2"], params["var2"])

    has_downsample = params.get("wr", None) is not None
    if not has_downsample:
        assert Cin == Cout, "identity residual requires in_channels == out_channels"

    T_TILE = _pick_time_tile(T, P, Cin, Cout)
    num_t = pl.cdiv(T, T_TILE)
    grid = (N, num_t)

    def rep_spec(shape):   # whole (small) array, resident across the grid
        return pl.BlockSpec(shape, lambda n, t: (0,) * len(shape))

    in_specs = [
        pl.BlockSpec((1, Cin, T_TILE), lambda n, t: (n, 0, t)),
        rep_spec((K, Cout, Cin)), rep_spec((Cout, 1)),
        rep_spec((K, Cout, Cout)), rep_spec((Cout, 1)),
    ]
    args = [x_nct, w1, b1, w2, b2]
    if has_downsample:
        wr = params["wr"][:, :, 0].astype(compute_dtype)               # (Cout, Cin)
        br = params["br"].astype(jnp.float32)[:, None]                 # (Cout, 1)
        in_specs += [rep_spec((Cout, Cin)), rep_spec((Cout, 1))]
        args += [wr, br]

    kernel = _make_temporal_block_kernel(K, dilation, has_downsample,
                                         carry_history=(num_t > 1))

    flops = 2 * N * T * K * (Cin * Cout + Cout * Cout)
    if has_downsample:
        flops += 2 * N * T * Cin * Cout
    bytes_accessed = int(x_nct.size) * x_nct.dtype.itemsize + N * Cout * T * 4
    for a in args[1:]:
        bytes_accessed += int(a.size) * a.dtype.itemsize

    return pl.pallas_call(
        kernel,
        out_shape=jax.ShapeDtypeStruct((N, Cout, T), jnp.float32),
        grid=grid,
        in_specs=in_specs,
        out_specs=pl.BlockSpec((1, Cout, T_TILE), lambda n, t: (n, 0, t)),
        scratch_shapes=[
            pltpu.VMEM((Cin, T_TILE + P), compute_dtype),    # staged x tile + causal history
            pltpu.VMEM((Cout, T_TILE + P), compute_dtype),   # staged conv1 act + history
        ],
        compiler_params=pltpu.CompilerParams(
            dimension_semantics=("parallel", "arbitrary")),
        cost_estimate=pl.CostEstimate(flops=int(flops), transcendentals=0,
                                      bytes_accessed=int(bytes_accessed)),
    )(*args)


# ----------------------------------------------------------------------------- reference
def _conv1d_nct(x, w_oik, b, dilation, padding):
    out = lax.conv_general_dilated(
        x, w_oik, window_strides=(1,), padding=[(padding, padding)],
        rhs_dilation=(dilation,), dimension_numbers=("NCH", "OIH", "NCH"))
    return out + b[None, :, None]


def _bn_eval(x, g, beta, mu, var):
    inv = 1.0 / jnp.sqrt(var + EPS)
    return (x - mu[None, :, None]) * inv[None, :, None] * g[None, :, None] + beta[None, :, None]


def temporal_block_reference(x_nct, params, kernel_size, dilation):
    T = x_nct.shape[2]
    P = (kernel_size - 1) * dilation
    out = _conv1d_nct(x_nct, params["w1"], params["b1"], dilation, P)[:, :, :T]
    out = jnp.maximum(_bn_eval(out, params["g1"], params["beta1"],
                               params["mu1"], params["var1"]), 0.0)
    out = _conv1d_nct(out, params["w2"], params["b2"], dilation, P)[:, :, :T]
    out = jnp.maximum(_bn_eval(out, params["g2"], params["beta2"],
                               params["mu2"], params["var2"]), 0.0)
    if params.get("wr", None) is not None:
        res = _conv1d_nct(x_nct, params["wr"], params["br"], 1, 0)
    else:
        res = x_nct
    return jnp.maximum(out + res, 0.0)


# ----------------------------------------------------------------------------- main
def _make_params(key, cin, cout, K, with_downsample):
    ks = jax.random.split(key, 14)
    p = {
        "w1": jax.random.normal(ks[0], (cout, cin, K), jnp.float32) * 0.2,
        "b1": 0.1 * jax.random.normal(ks[1], (cout,), jnp.float32),
        "g1": 1.0 + 0.1 * jax.random.normal(ks[2], (cout,), jnp.float32),
        "beta1": 0.1 * jax.random.normal(ks[3], (cout,), jnp.float32),
        "mu1": 0.05 * jax.random.normal(ks[4], (cout,), jnp.float32),
        "var1": 1.0 + 0.1 * jax.random.uniform(ks[5], (cout,), jnp.float32),
        "w2": jax.random.normal(ks[6], (cout, cout, K), jnp.float32) * 0.2,
        "b2": 0.1 * jax.random.normal(ks[7], (cout,), jnp.float32),
        "g2": 1.0 + 0.1 * jax.random.normal(ks[8], (cout,), jnp.float32),
        "beta2": 0.1 * jax.random.normal(ks[9], (cout,), jnp.float32),
        "mu2": 0.05 * jax.random.normal(ks[10], (cout,), jnp.float32),
        "var2": 1.0 + 0.1 * jax.random.uniform(ks[11], (cout,), jnp.float32),
    }
    if with_downsample:
        p["wr"] = jax.random.normal(ks[12], (cout, cin, 1), jnp.float32) * 0.3
        p["br"] = 0.1 * jax.random.normal(ks[13], (cout,), jnp.float32)
    return p


def _check(y, y_ref, rtol, atol):
    np.testing.assert_allclose(np.asarray(y), np.asarray(y_ref), rtol=rtol, atol=atol)


if __name__ == "__main__":
    root = jax.random.PRNGKey(0)
    k_p1, k_x1, k_p2, k_x2, k_p3, k_x3 = jax.random.split(root, 6)

    # Case 1: Cin != Cout (1x1 downsample residual), short sequence -> single time tile.
    # Checked in exact f32 mode (tight tolerance) AND bf16 MXU-operand mode.
    N, Cin, Cout, T, K, DIL = 2, 4, 8, 16, 3, 2
    params1 = _make_params(k_p1, Cin, Cout, K, with_downsample=True)
    x1 = jax.random.normal(k_x1, (N, Cin, T), jnp.float32)
    y1_ref = temporal_block_reference(x1, params1, K, DIL)
    y1_f32 = jax.block_until_ready(
        temporal_block_forward(x1, params1, K, DIL, compute_dtype=jnp.float32))
    _check(y1_f32, y1_ref, rtol=2e-4, atol=2e-4)
    y1 = jax.block_until_ready(temporal_block_forward(x1, params1, K, DIL))
    _check(y1, y1_ref, rtol=5e-2, atol=5e-2)
    assert y1.shape == (N, Cout, T)

    # Case 2: Cin == Cout (identity residual), long sequence -> multiple time tiles,
    # exercising the in-kernel causal-history carry across the "arbitrary" time axis.
    N2, C2, T2, K2, DIL2 = 2, 8, 4096, 3, 4
    params2 = _make_params(k_p2, C2, C2, K2, with_downsample=False)
    x2 = jax.random.normal(k_x2, (N2, C2, T2), jnp.float32)
    y2 = jax.block_until_ready(temporal_block_forward(x2, params2, K2, DIL2))
    y2_ref = temporal_block_reference(x2, params2, K2, DIL2)
    _check(y2, y2_ref, rtol=5e-2, atol=5e-2)
    assert y2.shape == (N2, C2, T2)

    # Case 3: unaligned T (not a multiple of 128) -> lane-dense tiles + masked tail,
    # exercising the partial last tile and the guarded history carry.
    N3, C3, T3, K3, DIL3 = 2, 8, 600, 3, 3
    params3 = _make_params(k_p3, C3, C3, K3, with_downsample=False)
    x3 = jax.random.normal(k_x3, (N3, C3, T3), jnp.float32)
    y3 = jax.block_until_ready(temporal_block_forward(x3, params3, K3, DIL3))
    y3_ref = temporal_block_reference(x3, params3, K3, DIL3)
    _check(y3, y3_ref, rtol=5e-2, atol=5e-2)
    assert y3.shape == (N3, C3, T3)

    print("KERNEL_OK")
</pallas_src>

<mosaic_0001>
module attributes {stable_mosaic.version = 11 : i64} {
  func.func @kernel(%arg0: i32, %arg1: i32, %arg2: memref<1x4x16xf32, #tpu.memory_space<vmem>>, %arg3: memref<3x8x4xf32, #tpu.memory_space<vmem>>, %arg4: memref<8x1xf32, #tpu.memory_space<vmem>>, %arg5: memref<3x8x8xf32, #tpu.memory_space<vmem>>, %arg6: memref<8x1xf32, #tpu.memory_space<vmem>>, %arg7: memref<8x4xf32, #tpu.memory_space<vmem>>, %arg8: memref<8x1xf32, #tpu.memory_space<vmem>>, %arg9: memref<1x8x16xf32, #tpu.memory_space<vmem>>, %arg10: memref<4x20xf32, #tpu.memory_space<vmem>>, %arg11: memref<8x20xf32, #tpu.memory_space<vmem>>) attributes {dimension_semantics = [#tpu.dimension_semantics<parallel>, #tpu.dimension_semantics<arbitrary>], iteration_bounds = array<i64: 2, 1>, scalar_prefetch = 0 : i64, scratch_operands = 2 : i64, tpu.core_type = #tpu.core_type<tc>, window_params = [{transform_indices = @transform_0, window_bounds = array<i64: 1, 4, 16>}, {pipeline_mode = #tpu.pipeline_mode<synchronous>, transform_indices = @transform_1, window_bounds = array<i64: 3, 8, 4>}, {pipeline_mode = #tpu.pipeline_mode<synchronous>, transform_indices = @transform_2, window_bounds = array<i64: 8, 1>}, {pipeline_mode = #tpu.pipeline_mode<synchronous>, transform_indices = @transform_3, window_bounds = array<i64: 3, 8, 8>}, {pipeline_mode = #tpu.pipeline_mode<synchronous>, transform_indices = @transform_4, window_bounds = array<i64: 8, 1>}, {pipeline_mode = #tpu.pipeline_mode<synchronous>, transform_indices = @transform_5, window_bounds = array<i64: 8, 4>}, {pipeline_mode = #tpu.pipeline_mode<synchronous>, transform_indices = @transform_6, window_bounds = array<i64: 8, 1>}, {transform_indices = @transform_7, window_bounds = array<i64: 1, 8, 16>}]} {
    %c0 = arith.constant 0 : index
    %c0_0 = arith.constant 0 : index
    %c0_1 = arith.constant 0 : index
    %0 = vector.load %arg2[%c0, %c0_0, %c0_1] : memref<1x4x16xf32, #tpu.memory_space<vmem>>, vector<1x4x16xf32>
    %1 = vector.shape_cast %0 : vector<1x4x16xf32> to vector<4x16xf32>
    %c0_2 = arith.constant 0 : index
    %c0_3 = arith.constant 0 : index
    %c0_4 = arith.constant 0 : index
    %2 = vector.load %arg3[%c0_2, %c0_3, %c0_4] : memref<3x8x4xf32, #tpu.memory_space<vmem>>, vector<3x8x4xf32>
    %c0_5 = arith.constant 0 : index
    %c0_6 = arith.constant 0 : index
    %c0_7 = arith.constant 0 : index
    %3 = vector.load %arg5[%c0_5, %c0_6, %c0_7] : memref<3x8x8xf32, #tpu.memory_space<vmem>>, vector<3x8x8xf32>
    %c0_i32 = arith.constant 0 : i32
    %4 = arith.cmpi eq, %arg1, %c0_i32 : i32
    %5 = arith.extui %4 : i1 to i32
    %c0_i32_8 = arith.constant 0 : i32
    %6 = arith.cmpi ne, %5, %c0_i32_8 : i32
    scf.if %6 {
      %cst_39 = arith.constant 0.000000e+00 : f32
      %56 = vector.broadcast %cst_39 : f32 to vector<4x4xf32>
      %c0_40 = arith.constant 0 : index
      %c0_41 = arith.constant 0 : index
      %57 = vector.load %arg10[%c0_40, %c0_41] : memref<4x20xf32, #tpu.memory_space<vmem>>, vector<4x4xf32>
      tpu.vector_store %arg10[%c0_40, %c0_41], %56 {strides = array<i32>} : memref<4x20xf32, #tpu.memory_space<vmem>>, vector<4x4xf32>,
      %cst_42 = arith.constant 0.000000e+00 : f32
      %58 = vector.broadcast %cst_42 : f32 to vector<8x4xf32>
      %c0_43 = arith.constant 0 : index
      %c0_44 = arith.constant 0 : index
      %59 = vector.load %arg11[%c0_43, %c0_44] : memref<8x20xf32, #tpu.memory_space<vmem>>, vector<8x4xf32>
      tpu.vector_store %arg11[%c0_43, %c0_44], %58 {strides = array<i32>} : memref<8x20xf32, #tpu.memory_space<vmem>>, vector<8x4xf32>,
    } else {
    }
    %c0_9 = arith.constant 0 : index
    %c4 = arith.constant 4 : index
    %7 = vector.load %arg10[%c0_9, %c4] : memref<4x20xf32, #tpu.memory_space<vmem>>, vector<4x16xf32>
    tpu.vector_store %arg10[%c0_9, %c4], %1 {strides = array<i32>} : memref<4x20xf32, #tpu.memory_space<vmem>>, vector<4x16xf32>,
    %8 = vector.extract_strided_slice %2 {offsets = [2, 0, 0], sizes = [1, 8, 4], strides = [1, 1, 1]} : vector<3x8x4xf32> to vector<1x8x4xf32>
    %9 = vector.shape_cast %8 : vector<1x8x4xf32> to vector<8x4xf32>
    %cst = arith.constant dense<0.000000e+00> : vector<8x16xf32>
    %10 = tpu.matmul %9, %1, %cst {dimension_numbers = #tpu.dot_dimension_numbers<[1], [0], [0], [1], [0, 0, 1, 1], [], []>} : vector<8x4xf32>, vector<4x16xf32>, vector<8x16xf32> -> vector<8x16xf32>
    %11 = vector.extract_strided_slice %2 {offsets = [0, 0, 0], sizes = [1, 8, 4], strides = [1, 1, 1]} : vector<3x8x4xf32> to vector<1x8x4xf32>
    %12 = vector.shape_cast %11 : vector<1x8x4xf32> to vector<8x4xf32>
    %c0_10 = arith.constant 0 : index
    %c0_11 = arith.constant 0 : index
    %13 = vector.load %arg10[%c0_10, %c0_11] : memref<4x20xf32, #tpu.memory_space<vmem>>, vector<4x16xf32>
    %cst_12 = arith.constant dense<0.000000e+00> : vector<8x16xf32>
    %14 = tpu.matmul %12, %13, %cst_12 {dimension_numbers = #tpu.dot_dimension_numbers<[1], [0], [0], [1], [0, 0, 1, 1], [], []>} : vector<8x4xf32>, vector<4x16xf32>, vector<8x16xf32> -> vector<8x16xf32>
    %15 = arith.addf %10, %14 : vector<8x16xf32>
    %16 = vector.extract_strided_slice %2 {offsets = [1, 0, 0], sizes = [1, 8, 4], strides = [1, 1, 1]} : vector<3x8x4xf32> to vector<1x8x4xf32>
    %17 = vector.shape_cast %16 : vector<1x8x4xf32> to vector<8x4xf32>
    %c0_13 = arith.constant 0 : index
    %c2 = arith.constant 2 : index
    %18 = vector.load %arg10[%c0_13, %c2] : memref<4x20xf32, #tpu.memory_space<vmem>>, vector<4x16xf32>
    %cst_14 = arith.constant dense<0.000000e+00> : vector<8x16xf32>
    %19 = tpu.matmul %17, %18, %cst_14 {dimension_numbers = #tpu.dot_dimension_numbers<[1], [0], [0], [1], [0, 0, 1, 1], [], []>} : vector<8x4xf32>, vector<4x16xf32>, vector<8x16xf32> -> vector<8x16xf32>
    %20 = arith.addf %15, %19 : vector<8x16xf32>
    %c0_15 = arith.constant 0 : index
    %c0_16 = arith.constant 0 : index
    %21 = vector.load %arg4[%c0_15, %c0_16] : memref<8x1xf32, #tpu.memory_space<vmem>>, vector<8x1xf32>
    %22 = vector.broadcast %21 : vector<8x1xf32> to vector<8x16xf32>
    %23 = arith.addf %20, %22 : vector<8x16xf32>
    %cst_17 = arith.constant 0.000000e+00 : f32
    %24 = vector.broadcast %cst_17 : f32 to vector<8x16xf32>
    %25 = arith.maximumf %23, %24 : vector<8x16xf32>
    %c0_18 = arith.constant 0 : index
    %c4_19 = arith.constant 4 : index
    %26 = vector.load %arg11[%c0_18, %c4_19] : memref<8x20xf32, #tpu.memory_space<vmem>>, vector<8x16xf32>
    tpu.vector_store %arg11[%c0_18, %c4_19], %25 {strides = array<i32>} : memref<8x20xf32, #tpu.memory_space<vmem>>, vector<8x16xf32>,
    %27 = vector.extract_strided_slice %3 {offsets = [2, 0, 0], sizes = [1, 8, 8], strides = [1, 1, 1]} : vector<3x8x8xf32> to vector<1x8x8xf32>
    %28 = vector.shape_cast %27 : vector<1x8x8xf32> to vector<8x8xf32>
    %cst_20 = arith.constant dense<0.000000e+00> : vector<8x16xf32>
    %29 = tpu.matmul %28, %25, %cst_20 {dimension_numbers = #tpu.dot_dimension_numbers<[1], [0], [0], [1], [0, 0, 1, 1], [], []>} : vector<8x8xf32>, vector<8x16xf32>, vector<8x16xf32> -> vector<8x16xf32>
    %30 = vector.extract_strided_slice %3 {offsets = [0, 0, 0], sizes = [1, 8, 8], strides = [1, 1, 1]} : vector<3x8x8xf32> to vector<1x8x8xf32>
    %31 = vector.shape_cast %30 : vector<1x8x8xf32> to vector<8x8xf32>
    %c0_21 = arith.constant 0 : index
    %c0_22 = arith.constant 0 : index
    %32 = vector.load %arg11[%c0_21, %c0_22] : memref<8x20xf32, #tpu.memory_space<vmem>>, vector<8x16xf32>
    %cst_23 = arith.constant dense<0.000000e+00> : vector<8x16xf32>
    %33 = tpu.matmul %31, %32, %cst_23 {dimension_numbers = #tpu.dot_dimension_numbers<[1], [0], [0], [1], [0, 0, 1, 1], [], []>} : vector<8x8xf32>, vector<8x16xf32>, vector<8x16xf32> -> vector<8x16xf32>
    %34 = arith.addf %29, %33 : vector<8x16xf32>
    %35 = vector.extract_strided_slice %3 {offsets = [1, 0, 0], sizes = [1, 8, 8], strides = [1, 1, 1]} : vector<3x8x8xf32> to vector<1x8x8xf32>
    %36 = vector.shape_cast %35 : vector<1x8x8xf32> to vector<8x8xf32>
    %c0_24 = arith.constant 0 : index
    %c2_25 = arith.constant 2 : index
    %37 = vector.load %arg11[%c0_24, %c2_25] : memref<8x20xf32, #tpu.memory_space<vmem>>, vector<8x16xf32>
    %cst_26 = arith.constant dense<0.000000e+00> : vector<8x16xf32>
    %38 = tpu.matmul %36, %37, %cst_26 {dimension_numbers = #tpu.dot_dimension_numbers<[1], [0], [0], [1], [0, 0, 1, 1], [], []>} : vector<8x8xf32>, vector<8x16xf32>, vector<8x16xf32> -> vector<8x16xf32>
    %39 = arith.addf %34, %38 : vector<8x16xf32>
    %c0_27 = arith.constant 0 : index
    %c0_28 = arith.constant 0 : index
    %40 = vector.load %arg6[%c0_27, %c0_28] : memref<8x1xf32, #tpu.memory_space<vmem>>, vector<8x1xf32>
    %41 = vector.broadcast %40 : vector<8x1xf32> to vector<8x16xf32>
    %42 = arith.addf %39, %41 : vector<8x16xf32>
    %cst_29 = arith.constant 0.000000e+00 : f32
    %43 = vector.broadcast %cst_29 : f32 to vector<8x16xf32>
    %44 = arith.maximumf %42, %43 : vector<8x16xf32>
    %c0_30 = arith.constant 0 : index
    %c0_31 = arith.constant 0 : index
    %45 = vector.load %arg7[%c0_30, %c0_31] : memref<8x4xf32, #tpu.memory_space<vmem>>, vector<8x4xf32>
    %cst_32 = arith.constant dense<0.000000e+00> : vector<8x16xf32>
    %46 = tpu.matmul %45, %1, %cst_32 {dimension_numbers = #tpu.dot_dimension_numbers<[1], [0], [0], [1], [0, 0, 1, 1], [], []>} : vector<8x4xf32>, vector<4x16xf32>, vector<8x16xf32> -> vector<8x16xf32>
    %c0_33 = arith.constant 0 : index
    %c0_34 = arith.constant 0 : index
    %47 = vector.load %arg8[%c0_33, %c0_34] : memref<8x1xf32, #tpu.memory_space<vmem>>, vector<8x1xf32>
    %48 = vector.broadcast %47 : vector<8x1xf32> to vector<8x16xf32>
    %49 = arith.addf %46, %48 : vector<8x16xf32>
    %50 = arith.addf %44, %49 : vector<8x16xf32>
    %cst_35 = arith.constant 0.000000e+00 : f32
    %51 = vector.broadcast %cst_35 : f32 to vector<8x16xf32>
    %52 = arith.maximumf %50, %51 : vector<8x16xf32>
    %c0_36 = arith.constant 0 : index
    %c0_37 = arith.constant 0 : index
    %c0_38 = arith.constant 0 : index
    %53 = vector.load %arg9[%c0_36, %c0_37, %c0_38] : memref<1x8x16xf32, #tpu.memory_space<vmem>>, vector<1x8x16xf32>
    %54 = vector.shape_cast %53 : vector<1x8x16xf32> to vector<8x16xf32>
    %55 = vector.shape_cast %52 : vector<8x16xf32> to vector<1x8x16xf32>
    tpu.vector_store %arg9[%c0_36, %c0_37, %c0_38], %55 {strides = array<i32>} : memref<1x8x16xf32, #tpu.memory_space<vmem>>, vector<1x8x16xf32>,
    return
  }
  func.func @transform_0(%arg0: i32, %arg1: i32) -> (i32, i32, i32) {
    %c0_i32 = arith.constant 0 : i32
    %c0_i32_0 = arith.constant 0 : i32
    return %arg0, %c0_i32, %arg1 : i32, i32, i32
  }
  func.func @transform_1(%arg0: i32, %arg1: i32) -> (i32, i32, i32) {
    %c0_i32 = arith.constant 0 : i32
    %c0_i32_0 = arith.constant 0 : i32
    %c0_i32_1 = arith.constant 0 : i32
    %c0_i32_2 = arith.constant 0 : i32
    return %c0_i32, %c0_i32_0, %c0_i32_1 : i32, i32, i32
  }
  func.func @transform_2(%arg0: i32, %arg1: i32) -> (i32, i32) {
    %c0_i32 = arith.constant 0 : i32
    %c0_i32_0 = arith.constant 0 : i32
    %c0_i32_1 = arith.constant 0 : i32
    return %c0_i32, %c0_i32_0 : i32, i32
  }
  func.func @transform_3(%arg0: i32, %arg1: i32) -> (i32, i32, i32) {
    %c0_i32 = arith.constant 0 : i32
    %c0_i32_0 = arith.constant 0 : i32
    %c0_i32_1 = arith.constant 0 : i32
    %c0_i32_2 = arith.constant 0 : i32
    return %c0_i32, %c0_i32_0, %c0_i32_1 : i32, i32, i32
  }
  func.func @transform_4(%arg0: i32, %arg1: i32) -> (i32, i32) {
    %c0_i32 = arith.constant 0 : i32
    %c0_i32_0 = arith.constant 0 : i32
    %c0_i32_1 = arith.constant 0 : i32
    return %c0_i32, %c0_i32_0 : i32, i32
  }
  func.func @transform_5(%arg0: i32, %arg1: i32) -> (i32, i32) {
    %c0_i32 = arith.constant 0 : i32
    %c0_i32_0 = arith.constant 0 : i32
    %c0_i32_1 = arith.constant 0 : i32
    return %c0_i32, %c0_i32_0 : i32, i32
  }
  func.func @transform_6(%arg0: i32, %arg1: i32) -> (i32, i32) {
    %c0_i32 = arith.constant 0 : i32
    %c0_i32_0 = arith.constant 0 : i32
    %c0_i32_1 = arith.constant 0 : i32
    return %c0_i32, %c0_i32_0 : i32, i32
  }
  func.func @transform_7(%arg0: i32, %arg1: i32) -> (i32, i32, i32) {
    %c0_i32 = arith.constant 0 : i32
    %c0_i32_0 = arith.constant 0 : i32
    return %arg0, %c0_i32, %arg1 : i32, i32, i32
  }
}

</mosaic_0001>

<llo_original>
// kernel: tpu_custom_call.1
$region0: #{tpu_custom_call.1}
  #allocation0 [shape = 'u32[]', space=smem, size = 0x4, offset = 0x4, fixed_abs, tag = 'smem constant byte address 0x4 - core index']
  #allocation1 [shape = 'u32[144,128]{1,0:T(1,128)}', space=vmem, size = 0x12000, scoped, tag = 'internal scratch']
  #allocation2 [shape = 'f32[4,20]{1,0:T(4,128)}', space=vmem, size = 0x800, scoped, tag = 'scratch operand']
  #allocation3 [shape = 'f32[8,20]{1,0:T(8,128)}', space=vmem, size = 0x1000, scoped, tag = 'scratch operand']
  %s0 = inlined_call_operand.vmem [shape: f32[2,4,16], index: 0, kind: input, shape index: {}]
  %s1 = inlined_call_operand.vmem [shape: f32[3,8,4], index: 1, kind: input, shape index: {}]
  %s2 = inlined_call_operand.vmem [shape: f32[8,1], index: 2, kind: input, shape index: {}]
  %s3 = inlined_call_operand.vmem [shape: f32[3,8,8], index: 3, kind: input, shape index: {}]
  %s4 = inlined_call_operand.vmem [shape: f32[8,1], index: 4, kind: input, shape index: {}]
  %s5 = inlined_call_operand.vmem [shape: f32[8,4], index: 5, kind: input, shape index: {}]
  %s6 = inlined_call_operand.vmem [shape: f32[8,1], index: 6, kind: input, shape index: {}]
  %s7 = inlined_call_operand.hbm [shape: f32[2,8,16], index: 7, kind: output, shape index: {}]
  %s8 = sld [smem:[#allocation0]]
  $region65: #{tpu_custom_call.1} parent=0
    _
  %s10 = ssub.s32 1, %s8
  %s11 = scalar_select 0, %s10, %s8
  $region1: #{tpu_custom_call.1} parent=0
    #allocation4 [shape = 'u8[8192]{0}', space=vmem, size = 0x2000, scoped, tag = 'output window, operand 0']
    #allocation5 [shape = 's32[2]{0}', space=sflag, size = 0x8, scoped, tag = 'scoped memory for tpu_custom_call.1']
    %12 = vsyncpa [#allocation5], 0
    %s13 = scalar_lea.sflag [#allocation5], 1
    %14 = vsyncpa %s13, 0
    loop: start=0, step=1, limit=4
    $region2: #{tpu_custom_call.1} parent=1 // loop_pre_header
      _
    $region3: #{tpu_custom_call.1} parent=1 // loop_header
      %s16 = sphi 0, %s20
      %p17 = scmp.ge.s32.totalorder %s16, 4
      %s23 = sphi 0, %s35
      %s24 = sphi 0, %s31
      %s25 = sphi 0, %s23
      %s26 = sphi 0, %s24
      %s27 = sphi 0, %s25
      %s28 = sphi 0, %s26
      %s40 = sphi 0, %s42
      %s43 = sphi 0, %s40
      %s44 = sphi 0, %s43
      %s60 = sphi 0, %s44
      %s64 = sphi 0, %s64
      %s66 = sphi 0, %s64
      %s67 = sphi 0, %s66
      %s81 = sphi 0, %s67
      %s85 = sphi 0, %s85
      %s87 = sphi 0, %s85
      %s88 = sphi 0, %s87
      %s102 = sphi 0, %s88
      %s106 = sphi 0, %s106
      %s108 = sphi 0, %s106
      %s109 = sphi 0, %s108
      %s123 = sphi 0, %s109
      %s127 = sphi 0, %s127
      %s129 = sphi 0, %s127
      %s130 = sphi 0, %s129
      %s144 = sphi 0, %s130
      %s148 = sphi 0, %s148
      %s150 = sphi 0, %s148
      %s151 = sphi 0, %s150
      %s165 = sphi 0, %s151
      %s169 = sphi 0, %s169
      %s171 = sphi 0, %s169
      %s172 = sphi 0, %s171
      %s186 = sphi 0, %s172
      %s194 = sphi 0, %s196
      %s197 = sphi 0, %s194
      %s198 = sphi 0, %s197
      %s214 = sphi 0, %s198
    $region4: #{tpu_custom_call.1} parent=1 // loop_header_branch
      %19 = sbr.rel (%p17) target = $region8
    $region5: #{tpu_custom_call.1} parent=1 // loop_body
      %s21 = ssub.s32 %s16, 1
      %s22 = ssub.s32 %s16, 2
      %s29 = sadd.s32 1, %s24
      %p30 = scmp.ge.s32.totalorder %s29, 1
      %s31 = scalar_select %p30, 0, %s29
      %s32 = sadd.s32 1, %s23
      %s33 = scalar_select %p30, %s32, %s23
      %p34 = scmp.ge.s32.totalorder %s33, 2
      %s35 = scalar_select %p34, 0, %s33
      %s36 = ssub.s32 %s23, %s35
      %s37 = ssub.s32 %s24, %s31
      %s38 = sor.u32 %s36, %s37
      %p39 = scmp.eq.s32.totalorder %s38, 0
      %s41 = sadd.s32 %s40, 1
      %s42 = scalar_select %p39, %s40, %s41
      %p45 = pneg %p39
      %p46 = scmp.eq.s32.totalorder %s16, 1
      %p47 = por %p45, %p46
      %p48 = scmp.ne.s32.totalorder %s40, %s43
      %p49 = scmp.eq.s32.totalorder %s16, 0
      %p50 = por %p48, %p49
      %p51 = scmp.ne.s32.totalorder %s40, %s43
      %p52 = scmp.eq.s32.totalorder %s21, 1
      %p53 = por %p51, %p52
      %p54 = scmp.ne.s32.totalorder %s43, %s44
      %p55 = scmp.eq.s32.totalorder %s21, 0
      %p56 = por %p54, %p55
      %p57 = scmp.ne.s32.totalorder %s43, %s44
      %p58 = scmp.eq.s32.totalorder %s22, 1
      %p59 = por %p57, %p58
      %p61 = scmp.ne.s32.totalorder %s44, %s60
      %p62 = scmp.eq.s32.totalorder %s22, 0
      %p63 = por %p61, %p62
      %s65 = sadd.s32 %s64, 1
      %p68 = scmp.eq.s32.totalorder %s16, 1
      %p69 = scmp.ne.s32.totalorder %s64, %s66
      %p70 = scmp.eq.s32.totalorder %s16, 0
      %p71 = por %p69, %p70
      %p72 = scmp.ne.s32.totalorder %s64, %s66
      %p73 = scmp.eq.s32.totalorder %s21, 1
      %p74 = por %p72, %p73
      %p75 = scmp.ne.s32.totalorder %s66, %s67
      %p76 = scmp.eq.s32.totalorder %s21, 0
      %p77 = por %p75, %p76
      %p78 = scmp.ne.s32.totalorder %s66, %s67
      %p79 = scmp.eq.s32.totalorder %s22, 1
      %p80 = por %p78, %p79
      %p82 = scmp.ne.s32.totalorder %s67, %s81
      %p83 = scmp.eq.s32.totalorder %s22, 0
      %p84 = por %p82, %p83
      %s86 = sadd.s32 %s85, 1
      %p89 = scmp.eq.s32.totalorder %s16, 1
      %p90 = scmp.ne.s32.totalorder %s85, %s87
      %p91 = scmp.eq.s32.totalorder %s16, 0
      %p92 = por %p90, %p91
      %p93 = scmp.ne.s32.totalorder %s85, %s87
      %p94 = scmp.eq.s32.totalorder %s21, 1
      %p95 = por %p93, %p94
      %p96 = scmp.ne.s32.totalorder %s87, %s88
      %p97 = scmp.eq.s32.totalorder %s21, 0
      %p98 = por %p96, %p97
      %p99 = scmp.ne.s32.totalorder %s87, %s88
      %p100 = scmp.eq.s32.totalorder %s22, 1
      %p101 = por %p99, %p100
      %p103 = scmp.ne.s32.totalorder %s88, %s102
      %p104 = scmp.eq.s32.totalorder %s22, 0
      %p105 = por %p103, %p104
      %s107 = sadd.s32 %s106, 1
      %p110 = scmp.eq.s32.totalorder %s16, 1
      %p111 = scmp.ne.s32.totalorder %s106, %s108
      %p112 = scmp.eq.s32.totalorder %s16, 0
      %p113 = por %p111, %p112
      %p114 = scmp.ne.s32.totalorder %s106, %s108
      %p115 = scmp.eq.s32.totalorder %s21, 1
      %p116 = por %p114, %p115
      %p117 = scmp.ne.s32.totalorder %s108, %s109
      %p118 = scmp.eq.s32.totalorder %s21, 0
      %p119 = por %p117, %p118
      %p120 = scmp.ne.s32.totalorder %s108, %s109
      %p121 = scmp.eq.s32.totalorder %s22, 1
      %p122 = por %p120, %p121
      %p124 = scmp.ne.s32.totalorder %s109, %s123
      %p125 = scmp.eq.s32.totalorder %s22, 0
      %p126 = por %p124, %p125
      %s128 = sadd.s32 %s127, 1
      %p131 = scmp.eq.s32.totalorder %s16, 1
      %p132 = scmp.ne.s32.totalorder %s127, %s129
      %p133 = scmp.eq.s32.totalorder %s16, 0
      %p134 = por %p132, %p133
      %p135 = scmp.ne.s32.totalorder %s127, %s129
      %p136 = scmp.eq.s32.totalorder %s21, 1
      %p137 = por %p135, %p136
      %p138 = scmp.ne.s32.totalorder %s129, %s130
      %p139 = scmp.eq.s32.totalorder %s21, 0
      %p140 = por %p138, %p139
      %p141 = scmp.ne.s32.totalorder %s129, %s130
      %p142 = scmp.eq.s32.totalorder %s22, 1
      %p143 = por %p141, %p142
      %p145 = scmp.ne.s32.totalorder %s130, %s144
      %p146 = scmp.eq.s32.totalorder %s22, 0
      %p147 = por %p145, %p146
      %s149 = sadd.s32 %s148, 1
      %p152 = scmp.eq.s32.totalorder %s16, 1
      %p153 = scmp.ne.s32.totalorder %s148, %s150
      %p154 = scmp.eq.s32.totalorder %s16, 0
      %p155 = por %p153, %p154
      %p156 = scmp.ne.s32.totalorder %s148, %s150
      %p157 = scmp.eq.s32.totalorder %s21, 1
      %p158 = por %p156, %p157
      %p159 = scmp.ne.s32.totalorder %s150, %s151
      %p160 = scmp.eq.s32.totalorder %s21, 0
      %p161 = por %p159, %p160
      %p162 = scmp.ne.s32.totalorder %s150, %s151
      %p163 = scmp.eq.s32.totalorder %s22, 1
      %p164 = por %p162, %p163
      %p166 = scmp.ne.s32.totalorder %s151, %s165
      %p167 = scmp.eq.s32.totalorder %s22, 0
      %p168 = por %p166, %p167
      %s170 = sadd.s32 %s169, 1
      %p173 = scmp.eq.s32.totalorder %s16, 1
      %p174 = scmp.ne.s32.totalorder %s169, %s171
      %p175 = scmp.eq.s32.totalorder %s16, 0
      %p176 = por %p174, %p175
      %p177 = scmp.ne.s32.totalorder %s169, %s171
      %p178 = scmp.eq.s32.totalorder %s21, 1
      %p179 = por %p177, %p178
      %p180 = scmp.ne.s32.totalorder %s171, %s172
      %p181 = scmp.eq.s32.totalorder %s21, 0
      %p182 = por %p180, %p181
      %p183 = scmp.ne.s32.totalorder %s171, %s172
      %p184 = scmp.eq.s32.totalorder %s22, 1
      %p185 = por %p183, %p184
      %p187 = scmp.ne.s32.totalorder %s172, %s186
      %p188 = scmp.eq.s32.totalorder %s22, 0
      %p189 = por %p187, %p188
      %s190 = ssub.s32 %s23, %s35
      %s191 = ssub.s32 %s24, %s31
      %s192 = sor.u32 %s190, %s191
      %p193 = scmp.eq.s32.totalorder %s192, 0
      %s195 = sadd.s32 %s194, 1
      %s196 = scalar_select %p193, %s194, %s195
      %p199 = pneg %p193
      %p200 = scmp.eq.s32.totalorder %s16, 1
      %p201 = por %p199, %p200
      %p202 = scmp.ne.s32.totalorder %s194, %s197
      %p203 = scmp.eq.s32.totalorder %s16, 0
      %p204 = por %p202, %p203
      %p205 = scmp.ne.s32.totalorder %s194, %s197
      %p206 = scmp.eq.s32.totalorder %s21, 1
      %p207 = por %p205, %p206
      %p208 = scmp.ne.s32.totalorder %s197, %s198
      %p209 = scmp.eq.s32.totalorder %s21, 0
      %p210 = por %p208, %p209
      %p211 = scmp.ne.s32.totalorder %s197, %s198
      %p212 = scmp.eq.s32.totalorder %s22, 1
      %p213 = por %p211, %p212
      %p215 = scmp.ne.s32.totalorder %s198, %s214
      %p216 = scmp.eq.s32.totalorder %s22, 0
      %p217 = por %p215, %p216
      %p218 = scmp.le.s32.totalorder 1, %s16
      %p219 = scmp.lt.s32.totalorder %s16, 3
      %p220 = pnand %p218, %p219
      %p221 = pneg %p220
      // Predicated region
      $region9: #{tpu_custom_call.1} parent=5 // pred_check
        _
      $region10: #{tpu_custom_call.1} parent=5 // pred_check_branch
        %223 = sbr.rel (%p220) target = $region12
      $region11: #{tpu_custom_call.1} parent=5 // pred_region
        %s224 = ssub.s32 %s16, 1
        // Predicated region
        $region13: #{tpu_custom_call.1} parent=11 // pred_check
          %p225 = pneg %p77
        $region14: #{tpu_custom_call.1} parent=11 // pred_check_branch
          %227 = sbr.rel (%p225) target = $region16
        $region15: #{tpu_custom_call.1} parent=11 // pred_region
          _
        $region16: #{tpu_custom_call.1} parent=11 // pred_fallthru
          _
        // Predicated region
        $region17: #{tpu_custom_call.1} parent=11 // pred_check
          %p228 = pneg %p98
        $region18: #{tpu_custom_call.1} parent=11 // pred_check_branch
          %230 = sbr.rel (%p228) target = $region20
        $region19: #{tpu_custom_call.1} parent=11 // pred_region
          _
        $region20: #{tpu_custom_call.1} parent=11 // pred_fallthru
          _
        // Predicated region
        $region21: #{tpu_custom_call.1} parent=11 // pred_check
          %p231 = pneg %p119
        $region22: #{tpu_custom_call.1} parent=11 // pred_check_branch
          %233 = sbr.rel (%p231) target = $region24
        $region23: #{tpu_custom_call.1} parent=11 // pred_region
          _
        $region24: #{tpu_custom_call.1} parent=11 // pred_fallthru
          _
        // Predicated region
        $region25: #{tpu_custom_call.1} parent=11 // pred_check
          %p234 = pneg %p140
        $region26: #{tpu_custom_call.1} parent=11 // pred_check_branch
          %236 = sbr.rel (%p234) target = $region28
        $region27: #{tpu_custom_call.1} parent=11 // pred_region
          _
        $region28: #{tpu_custom_call.1} parent=11 // pred_fallthru
          _
        // Predicated region
        $region29: #{tpu_custom_call.1} parent=11 // pred_check
          %p237 = pneg %p161
        $region30: #{tpu_custom_call.1} parent=11 // pred_check_branch
          %239 = sbr.rel (%p237) target = $region32
        $region31: #{tpu_custom_call.1} parent=11 // pred_region
          _
        $region32: #{tpu_custom_call.1} parent=11 // pred_fallthru
          _
        // Predicated region
        $region33: #{tpu_custom_call.1} parent=11 // pred_check
          %p240 = pneg %p182
        $region34: #{tpu_custom_call.1} parent=11 // pred_check_branch
          %242 = sbr.rel (%p240) target = $region36
        $region35: #{tpu_custom_call.1} parent=11 // pred_region
          _
        $region36: #{tpu_custom_call.1} parent=11 // pred_fallthru
          _
      $region12: #{tpu_custom_call.1} parent=5 // pred_fallthru
        _
      %p243 = scmp.lt.s32.totalorder %s16, 2
      // Predicated region
      $region37: #{tpu_custom_call.1} parent=5 // pred_check
        %p244 = pneg %p243
      $region38: #{tpu_custom_call.1} parent=5 // pred_check_branch
        %246 = sbr.rel (%p244) target = $region40
      $region39: #{tpu_custom_call.1} parent=5 // pred_region
        // Predicated region
        $region41: #{tpu_custom_call.1} parent=39 // pred_check
          %p247 = pneg %p50
        $region42: #{tpu_custom_call.1} parent=39 // pred_check_branch
          %249 = sbr.rel (%p247) target = $region44
        $region43: #{tpu_custom_call.1} parent=39 // pred_region
          %p250 = scmp.lt.s32.totalorder %s23, 1
          %s251 = scalar_select %p250, %s23, 1
          %p252 = scmp.lt.s32.totalorder %s24, 0
          %s253 = scalar_select %p252, %s24, 0
          %s254 = sadd.s32 %s253, %s251
          %s255 = smul.addr %s254, 4
          %s256 = scalar_lea.vmem %s0, %s255
        $region44: #{tpu_custom_call.1} parent=39 // pred_fallthru
          _
      $region40: #{tpu_custom_call.1} parent=5 // pred_fallthru
        _
      %p257 = scmp.le.s32.totalorder 1, %s16
      %p258 = scmp.lt.s32.totalorder %s16, 3
      %p259 = pnand %p257, %p258
      %p260 = pneg %p259
      // Predicated region
      $region45: #{tpu_custom_call.1} parent=5 // pred_check
        _
      $region46: #{tpu_custom_call.1} parent=5 // pred_check_branch
        %262 = sbr.rel (%p259) target = $region48
      $region47: #{tpu_custom_call.1} parent=5 // pred_region
        %s263 = ssub.s32 %s16, 1
        %p264 = scmp.lt.s32.totalorder %s25, 1
        %s265 = scalar_select %p264, %s25, 1
        %p266 = scmp.lt.s32.totalorder %s26, 0
        %s267 = scalar_select %p266, %s26, 0
        %s268 = sadd.s32 %s267, %s265
        %s269 = smul.addr %s268, 4
        %s270 = scalar_lea.vmem %s0, %s269
        %p271 = pneg %p56
        %p272 = pneg %p53
        %p273 = pneg %p77
        %p274 = pneg %p74
        %p275 = pneg %p98
        %p276 = pneg %p95
        %p277 = pneg %p119
        %p278 = pneg %p116
        %p279 = pneg %p140
        %p280 = pneg %p137
        %p281 = pneg %p161
        %p282 = pneg %p158
        %p283 = pneg %p182
        %p284 = pneg %p179
        %p285 = pneg %p210
        %p286 = pneg %p207
        %s287 = sand.u32 %s197, 1
        %s288 = scalar_lea.sflag [#allocation5], %s287
        %s289 = sand.u32 %s197, 1
        %s290 = smul.addr %s289, 8
        %s291 = scalar_lea.vmem [#allocation4], %s290
        %p292 = scmp.lt.s32.totalorder %s25, 1
        %s293 = scalar_select %p292, %s25, 1
        %p294 = scmp.lt.s32.totalorder %s26, 0
        %s295 = scalar_select %p294, %s26, 0
        %s296 = sadd.s32 %s295, %s293
        %s297 = smul.addr %s296, 4
        %s298 = scalar_lea.vmem %s0, %s297
        %v299 = vld [vmem:[%s298] sm:$0xf]
        %v300 = vld [vmem:[%s1] sm:$0xff]
        %v301 = vld [vmem:[%s1 + $0x8] sm:$0xff]
        %v302 = vld [vmem:[%s1 + $0x10] sm:$0xff]
        %v303 = vld [vmem:[%s3] sm:$0xff]
        %v304 = vld [vmem:[%s3 + $0x8] sm:$0xff]
        %v305 = vld [vmem:[%s3 + $0x10] sm:$0xff]
        %p306 = scmp.eq.s32.totalorder %s26, 0
        // Predicated region
        $region49: #{tpu_custom_call.1} parent=47 // pred_check
          %p307 = pneg %p306
        $region50: #{tpu_custom_call.1} parent=47 // pred_check_branch
          %309 = sbr.rel (%p307) target = $region52
        $region51: #{tpu_custom_call.1} parent=47 // pred_region
          %vm310 = vcmask 27648
          %311 = vst.msk [vmem:[#allocation2] sm:$0xf] %vm310, 0.0
          %vm312 = vcmask 31744
          %313 = vst.msk [vmem:[#allocation3] sm:$0xff] %vm312, 0.0
        $region52: #{tpu_custom_call.1} parent=47 // pred_fallthru
          _
        %315 = vrot.lane.b32.xlu0 %v299, 4
        %v316 = vpop.permute.xlu0 %315
        %vm318 = vcmask 158752
        %319 = vst.msk [vmem:[#allocation2] sm:$0xf] %vm318, %v316
        %v320 = vld [vmem:[#allocation2] sm:$0xf]
        %vm321 = vcmask 31744
        %v323 = vsel %vm321, %v300, 0
        %vm325 = vcmask 1043456
        %v327 = vsel %vm325, %v320, 0
        %329 = vmatprep.subr.mxu0 0.0
        %330 = vmatpush1.msra.mxu0 0.0
        %331 = vmatprep.subr.mxu0 0.0
        %332 = vmatpush1.msra.mxu0 0.0
        %333 = vmatprep.subr.mxu0 0.0
        %334 = vmatpush1.msra.mxu0 0.0
        %335 = vmatprep.subr.mxu0 0.0
        %336 = vmatpush1.msra.mxu0 0.0
        %337 = vmatprep.subr.mxu0 0.0
        %338 = vmatpush1.msra.mxu0 0.0
        %339 = vmatprep.subr.mxu0 0.0
        %340 = vmatpush1.msra.mxu0 0.0
        %341 = vmatprep.subr.mxu0 0.0
        %342 = vmatpush1.msra.mxu0 0.0
        %343 = vmatprep.subr.mxu0 0.0
        %344 = vmatpush1.msra.mxu0 0.0
        %345 = vmatprep.subr.mxu0 0.0
        %346 = vmatpush1.msra.mxu0 0.0
        %347 = vmatprep.subr.mxu0 0.0
        %348 = vmatpush1.msra.mxu0 0.0
        %349 = vmatprep.subr.mxu0 0.0
        %350 = vmatpush1.msra.mxu0 0.0
        %351 = vmatprep.subr.mxu0 0.0
        %352 = vmatpush1.msra.mxu0 0.0
        %353 = vmatprep.subr.mxu0 0.0
        %354 = vmatpush1.msra.mxu0 0.0
        %355 = vmatprep.subr.mxu0 0.0
        %356 = vmatpush1.msra.mxu0 0.0
        %357 = vmatprep.subr.mxu0 0.0
        %358 = vmatpush1.msra.mxu0 0.0
        %359 = vmatprep.subr.mxu0 0.0
        %360 = vmatpush1.msra.mxu0 %v327
        %361 = vmatprep.subr.mxu0 0.0
        %362 = vmatpush2.msra.mxu0 0.0
        %363 = vmatprep.subr.mxu0 0.0
        %364 = vmatpush2.msra.mxu0 0.0
        %365 = vmatprep.subr.mxu0 0.0
        %366 = vmatpush2.msra.mxu0 0.0
        %367 = vmatprep.subr.mxu0 0.0
        %368 = vmatpush2.msra.mxu0 0.0
        %369 = vmatprep.subr.mxu0 0.0
        %370 = vmatpush2.msra.mxu0 0.0
        %371 = vmatprep.subr.mxu0 0.0
        %372 = vmatpush2.msra.mxu0 0.0
        %373 = vmatprep.subr.mxu0 0.0
        %374 = vmatpush2.msra.mxu0 0.0
        %375 = vmatprep.subr.mxu0 0.0
        %376 = vmatpush2.msra.mxu0 0.0
        %377 = vmatprep.subr.mxu0 0.0
        %378 = vmatpush2.msra.mxu0 0.0
        %379 = vmatprep.subr.mxu0 0.0
        %380 = vmatpush2.msra.mxu0 0.0
        %381 = vmatprep.subr.mxu0 0.0
        %382 = vmatpush2.msra.mxu0 0.0
        %383 = vmatprep.subr.mxu0 0.0
        %384 = vmatpush2.msra.mxu0 0.0
        %385 = vmatprep.subr.mxu0 0.0
        %386 = vmatpush2.msra.mxu0 0.0
        %387 = vmatprep.subr.mxu0 0.0
        %388 = vmatpush2.msra.mxu0 0.0
        %389 = vmatprep.subr.mxu0 0.0
        %390 = vmatpush2.msra.mxu0 0.0
        %391 = vmatprep.subr.mxu0 0.0
        %392 = vmatpush2.msra.mxu0 0.0
        %393 = vmatprep.mubr.f32.mxu0 0.0
        %394 = vmatmul.mubr.f32.gmra.mxu0 %v323
        %v395 = vpop.f32.mrf.mxu0
        %v396 = vadd.f32 0.0, %v395
        %v397 = vpop.f32.mrf.mxu0
        %398 = vdwg.mxu0
        %v400 = vsel %vm321, %v302, 0
        %v402 = vsel %vm325, %v299, 0
        %404 = vmatprep.subr.mxu0 0.0
        %405 = vmatpush1.msra.mxu0 0.0
        %406 = vmatprep.subr.mxu0 0.0
        %407 = vmatpush1.msra.mxu0 0.0
        %408 = vmatprep.subr.mxu0 0.0
        %409 = vmatpush1.msra.mxu0 0.0
        %410 = vmatprep.subr.mxu0 0.0
        %411 = vmatpush1.msra.mxu0 0.0
        %412 = vmatprep.subr.mxu0 0.0
        %413 = vmatpush1.msra.mxu0 0.0
        %414 = vmatprep.subr.mxu0 0.0
        %415 = vmatpush1.msra.mxu0 0.0
        %416 = vmatprep.subr.mxu0 0.0
        %417 = vmatpush1.msra.mxu0 0.0
        %418 = vmatprep.subr.mxu0 0.0
        %419 = vmatpush1.msra.mxu0 0.0
        %420 = vmatprep.subr.mxu0 0.0
        %421 = vmatpush1.msra.mxu0 0.0
        %422 = vmatprep.subr.mxu0 0.0
        %423 = vmatpush1.msra.mxu0 0.0
        %424 = vmatprep.subr.mxu0 0.0
        %425 = vmatpush1.msra.mxu0 0.0
        %426 = vmatprep.subr.mxu0 0.0
        %427 = vmatpush1.msra.mxu0 0.0
        %428 = vmatprep.subr.mxu0 0.0
        %429 = vmatpush1.msra.mxu0 0.0
        %430 = vmatprep.subr.mxu0 0.0
        %431 = vmatpush1.msra.mxu0 0.0
        %432 = vmatprep.subr.mxu0 0.0
        %433 = vmatpush1.msra.mxu0 0.0
        %434 = vmatprep.subr.mxu0 0.0
        %435 = vmatpush1.msra.mxu0 %v402
        %436 = vmatprep.subr.mxu0 0.0
        %437 = vmatpush2.msra.mxu0 0.0
        %438 = vmatprep.subr.mxu0 0.0
        %439 = vmatpush2.msra.mxu0 0.0
        %440 = vmatprep.subr.mxu0 0.0
        %441 = vmatpush2.msra.mxu0 0.0
        %442 = vmatprep.subr.mxu0 0.0
        %443 = vmatpush2.msra.mxu0 0.0
        %444 = vmatprep.subr.mxu0 0.0
        %445 = vmatpush2.msra.mxu0 0.0
        %446 = vmatprep.subr.mxu0 0.0
        %447 = vmatpush2.msra.mxu0 0.0
        %448 = vmatprep.subr.mxu0 0.0
        %449 = vmatpush2.msra.mxu0 0.0
        %450 = vmatprep.subr.mxu0 0.0
        %451 = vmatpush2.msra.mxu0 0.0
        %452 = vmatprep.subr.mxu0 0.0
        %453 = vmatpush2.msra.mxu0 0.0
        %454 = vmatprep.subr.mxu0 0.0
        %455 = vmatpush2.msra.mxu0 0.0
        %456 = vmatprep.subr.mxu0 0.0
        %457 = vmatpush2.msra.mxu0 0.0
        %458 = vmatprep.subr.mxu0 0.0
        %459 = vmatpush2.msra.mxu0 0.0
        %460 = vmatprep.subr.mxu0 0.0
        %461 = vmatpush2.msra.mxu0 0.0
        %462 = vmatprep.subr.mxu0 0.0
        %463 = vmatpush2.msra.mxu0 0.0
        %464 = vmatprep.subr.mxu0 0.0
        %465 = vmatpush2.msra.mxu0 0.0
        %466 = vmatprep.subr.mxu0 0.0
        %467 = vmatpush2.msra.mxu0 0.0
        %468 = vmatprep.mubr.f32.mxu0 0.0
        %469 = vmatmul.mubr.f32.gmra.mxu0 %v400
        %v470 = vpop.f32.mrf.mxu0
        %v471 = vadd.f32 %v396, %v470
        %v472 = vpop.f32.mrf.mxu0
        %473 = vdwg.mxu0
        %474 = vrot.lane.b32.xlu0 %v320, 126
        %v475 = vpop.permute.xlu0 %474
        %v477 = vsel %vm321, %v301, 0
        %v479 = vsel %vm325, %v475, 0
        %481 = vmatprep.subr.mxu0 0.0
        %482 = vmatpush1.msra.mxu0 0.0
        %483 = vmatprep.subr.mxu0 0.0
        %484 = vmatpush1.msra.mxu0 0.0
        %485 = vmatprep.subr.mxu0 0.0
        %486 = vmatpush1.msra.mxu0 0.0
        %487 = vmatprep.subr.mxu0 0.0
        %488 = vmatpush1.msra.mxu0 0.0
        %489 = vmatprep.subr.mxu0 0.0
        %490 = vmatpush1.msra.mxu0 0.0
        %491 = vmatprep.subr.mxu0 0.0
        %492 = vmatpush1.msra.mxu0 0.0
        %493 = vmatprep.subr.mxu0 0.0
        %494 = vmatpush1.msra.mxu0 0.0
        %495 = vmatprep.subr.mxu0 0.0
        %496 = vmatpush1.msra.mxu0 0.0
        %497 = vmatprep.subr.mxu0 0.0
        %498 = vmatpush1.msra.mxu0 0.0
        %499 = vmatprep.subr.mxu0 0.0
        %500 = vmatpush1.msra.mxu0 0.0
        %501 = vmatprep.subr.mxu0 0.0
        %502 = vmatpush1.msra.mxu0 0.0
        %503 = vmatprep.subr.mxu0 0.0
        %504 = vmatpush1.msra.mxu0 0.0
        %505 = vmatprep.subr.mxu0 0.0
        %506 = vmatpush1.msra.mxu0 0.0
        %507 = vmatprep.subr.mxu0 0.0
        %508 = vmatpush1.msra.mxu0 0.0
        %509 = vmatprep.subr.mxu0 0.0
        %510 = vmatpush1.msra.mxu0 0.0
        %511 = vmatprep.subr.mxu0 0.0
        %512 = vmatpush1.msra.mxu0 %v479
        %513 = vmatprep.subr.mxu0 0.0
        %514 = vmatpush2.msra.mxu0 0.0
        %515 = vmatprep.subr.mxu0 0.0
        %516 = vmatpush2.msra.mxu0 0.0
        %517 = vmatprep.subr.mxu0 0.0
        %518 = vmatpush2.msra.mxu0 0.0
        %519 = vmatprep.subr.mxu0 0.0
        %520 = vmatpush2.msra.mxu0 0.0
        %521 = vmatprep.subr.mxu0 0.0
        %522 = vmatpush2.msra.mxu0 0.0
        %523 = vmatprep.subr.mxu0 0.0
        %524 = vmatpush2.msra.mxu0 0.0
        %525 = vmatprep.subr.mxu0 0.0
        %526 = vmatpush2.msra.mxu0 0.0
        %527 = vmatprep.subr.mxu0 0.0
        %528 = vmatpush2.msra.mxu0 0.0
        %529 = vmatprep.subr.mxu0 0.0
        %530 = vmatpush2.msra.mxu0 0.0
        %531 = vmatprep.subr.mxu0 0.0
        %532 = vmatpush2.msra.mxu0 0.0
        %533 = vmatprep.subr.mxu0 0.0
        %534 = vmatpush2.msra.mxu0 0.0
        %535 = vmatprep.subr.mxu0 0.0
        %536 = vmatpush2.msra.mxu0 0.0
        %537 = vmatprep.subr.mxu0 0.0
        %538 = vmatpush2.msra.mxu0 0.0
        %539 = vmatprep.subr.mxu0 0.0
        %540 = vmatpush2.msra.mxu0 0.0
        %541 = vmatprep.subr.mxu0 0.0
        %542 = vmatpush2.msra.mxu0 0.0
        %543 = vmatprep.subr.mxu0 0.0
        %544 = vmatpush2.msra.mxu0 0.0
        %545 = vmatprep.mubr.f32.mxu0 0.0
        %546 = vmatmul.mubr.f32.gmra.mxu0 %v477
        %v547 = vpop.f32.mrf.mxu0
        %v548 = vadd.f32 0.0, %v547
        %v549 = vpop.f32.mrf.mxu0
        %550 = vdwg.mxu0
        %v551 = vadd.f32 %v471, %v548
        %v552 = vld [vmem:[%s2] sm:$0xff]
        %554 = vset.pattern.permute.xlu0 0
        %555 = vperm.xlu0 %554, %v552
        %v556 = vpop.permute.xlu0 %555
        %v558 = vadd.f32 %v551, %v556
        %v559 = vmax.f32 %v558, 0.0
        %561 = vrot.lane.b32.xlu0 %v559, 4
        %v562 = vpop.permute.xlu0 %561
        %vm564 = vcmask 162848
        %565 = vst.msk [vmem:[#allocation3] sm:$0xff] %vm564, %v562
        %v566 = vld [vmem:[#allocation3] sm:$0xff]
        %vm567 = vcmask 64512
        %v569 = vsel %vm567, %v303, 0
        %571 = vmatprep.subr.mxu0 0.0
        %572 = vmatpush1.msra.mxu0 0.0
        %573 = vmatprep.subr.mxu0 0.0
        %574 = vmatpush1.msra.mxu0 0.0
        %575 = vmatprep.subr.mxu0 0.0
        %576 = vmatpush1.msra.mxu0 0.0
        %577 = vmatprep.subr.mxu0 0.0
        %578 = vmatpush1.msra.mxu0 0.0
        %579 = vmatprep.subr.mxu0 0.0
        %580 = vmatpush1.msra.mxu0 0.0
        %581 = vmatprep.subr.mxu0 0.0
        %582 = vmatpush1.msra.mxu0 0.0
        %583 = vmatprep.subr.mxu0 0.0
        %584 = vmatpush1.msra.mxu0 0.0
        %585 = vmatprep.subr.mxu0 0.0
        %586 = vmatpush1.msra.mxu0 0.0
        %587 = vmatprep.subr.mxu0 0.0
        %588 = vmatpush1.msra.mxu0 0.0
        %589 = vmatprep.subr.mxu0 0.0
        %590 = vmatpush1.msra.mxu0 0.0
        %591 = vmatprep.subr.mxu0 0.0
        %592 = vmatpush1.msra.mxu0 0.0
        %593 = vmatprep.subr.mxu0 0.0
        %594 = vmatpush1.msra.mxu0 0.0
        %595 = vmatprep.subr.mxu0 0.0
        %596 = vmatpush1.msra.mxu0 0.0
        %597 = vmatprep.subr.mxu0 0.0
        %598 = vmatpush1.msra.mxu0 0.0
        %599 = vmatprep.subr.mxu0 0.0
        %600 = vmatpush1.msra.mxu0 0.0
        %601 = vmatprep.subr.mxu0 0.0
        %602 = vmatpush1.msra.mxu0 %v566
        %603 = vmatprep.subr.mxu0 0.0
        %604 = vmatpush2.msra.mxu0 0.0
        %605 = vmatprep.subr.mxu0 0.0
        %606 = vmatpush2.msra.mxu0 0.0
        %607 = vmatprep.subr.mxu0 0.0
        %608 = vmatpush2.msra.mxu0 0.0
        %609 = vmatprep.subr.mxu0 0.0
        %610 = vmatpush2.msra.mxu0 0.0
        %611 = vmatprep.subr.mxu0 0.0
        %612 = vmatpush2.msra.mxu0 0.0
        %613 = vmatprep.subr.mxu0 0.0
        %614 = vmatpush2.msra.mxu0 0.0
        %615 = vmatprep.subr.mxu0 0.0
        %616 = vmatpush2.msra.mxu0 0.0
        %617 = vmatprep.subr.mxu0 0.0
        %618 = vmatpush2.msra.mxu0 0.0
        %619 = vmatprep.subr.mxu0 0.0
        %620 = vmatpush2.msra.mxu0 0.0
        %621 = vmatprep.subr.mxu0 0.0
        %622 = vmatpush2.msra.mxu0 0.0
        %623 = vmatprep.subr.mxu0 0.0
        %624 = vmatpush2.msra.mxu0 0.0
        %625 = vmatprep.subr.mxu0 0.0
        %626 = vmatpush2.msra.mxu0 0.0
        %627 = vmatprep.subr.mxu0 0.0
        %628 = vmatpush2.msra.mxu0 0.0
        %629 = vmatprep.subr.mxu0 0.0
        %630 = vmatpush2.msra.mxu0 0.0
        %631 = vmatprep.subr.mxu0 0.0
        %632 = vmatpush2.msra.mxu0 0.0
        %633 = vmatprep.subr.mxu0 0.0
        %634 = vmatpush2.msra.mxu0 0.0
        %635 = vmatprep.mubr.f32.mxu0 0.0
        %636 = vmatmul.mubr.f32.gmra.mxu0 %v569
        %v637 = vpop.f32.mrf.mxu0
        %v638 = vadd.f32 0.0, %v637
        %v639 = vpop.f32.mrf.mxu0
        %640 = vdwg.mxu0
        %v642 = vsel %vm567, %v305, 0
        %644 = vmatprep.subr.mxu0 0.0
        %645 = vmatpush1.msra.mxu0 0.0
        %646 = vmatprep.subr.mxu0 0.0
        %647 = vmatpush1.msra.mxu0 0.0
        %648 = vmatprep.subr.mxu0 0.0
        %649 = vmatpush1.msra.mxu0 0.0
        %650 = vmatprep.subr.mxu0 0.0
        %651 = vmatpush1.msra.mxu0 0.0
        %652 = vmatprep.subr.mxu0 0.0
        %653 = vmatpush1.msra.mxu0 0.0
        %654 = vmatprep.subr.mxu0 0.0
        %655 = vmatpush1.msra.mxu0 0.0
        %656 = vmatprep.subr.mxu0 0.0
        %657 = vmatpush1.msra.mxu0 0.0
        %658 = vmatprep.subr.mxu0 0.0
        %659 = vmatpush1.msra.mxu0 0.0
        %660 = vmatprep.subr.mxu0 0.0
        %661 = vmatpush1.msra.mxu0 0.0
        %662 = vmatprep.subr.mxu0 0.0
        %663 = vmatpush1.msra.mxu0 0.0
        %664 = vmatprep.subr.mxu0 0.0
        %665 = vmatpush1.msra.mxu0 0.0
        %666 = vmatprep.subr.mxu0 0.0
        %667 = vmatpush1.msra.mxu0 0.0
        %668 = vmatprep.subr.mxu0 0.0
        %669 = vmatpush1.msra.mxu0 0.0
        %670 = vmatprep.subr.mxu0 0.0
        %671 = vmatpush1.msra.mxu0 0.0
        %672 = vmatprep.subr.mxu0 0.0
        %673 = vmatpush1.msra.mxu0 0.0
        %674 = vmatprep.subr.mxu0 0.0
        %675 = vmatpush1.msra.mxu0 %v559
        %676 = vmatprep.subr.mxu0 0.0
        %677 = vmatpush2.msra.mxu0 0.0
        %678 = vmatprep.subr.mxu0 0.0
        %679 = vmatpush2.msra.mxu0 0.0
        %680 = vmatprep.subr.mxu0 0.0
        %681 = vmatpush2.msra.mxu0 0.0
        %682 = vmatprep.subr.mxu0 0.0
        %683 = vmatpush2.msra.mxu0 0.0
        %684 = vmatprep.subr.mxu0 0.0
        %685 = vmatpush2.msra.mxu0 0.0
        %686 = vmatprep.subr.mxu0 0.0
        %687 = vmatpush2.msra.mxu0 0.0
        %688 = vmatprep.subr.mxu0 0.0
        %689 = vmatpush2.msra.mxu0 0.0
        %690 = vmatprep.subr.mxu0 0.0
        %691 = vmatpush2.msra.mxu0 0.0
        %692 = vmatprep.subr.mxu0 0.0
        %693 = vmatpush2.msra.mxu0 0.0
        %694 = vmatprep.subr.mxu0 0.0
        %695 = vmatpush2.msra.mxu0 0.0
        %696 = vmatprep.subr.mxu0 0.0
        %697 = vmatpush2.msra.mxu0 0.0
        %698 = vmatprep.subr.mxu0 0.0
        %699 = vmatpush2.msra.mxu0 0.0
        %700 = vmatprep.subr.mxu0 0.0
        %701 = vmatpush2.msra.mxu0 0.0
        %702 = vmatprep.subr.mxu0 0.0
        %703 = vmatpush2.msra.mxu0 0.0
        %704 = vmatprep.subr.mxu0 0.0
        %705 = vmatpush2.msra.mxu0 0.0
        %706 = vmatprep.subr.mxu0 0.0
        %707 = vmatpush2.msra.mxu0 0.0
        %708 = vmatprep.mubr.f32.mxu0 0.0
        %709 = vmatmul.mubr.f32.gmra.mxu0 %v642
        %v710 = vpop.f32.mrf.mxu0
        %v711 = vadd.f32 %v638, %v710
        %v712 = vpop.f32.mrf.mxu0
        %713 = vdwg.mxu0
        %715 = vrot.lane.b32.xlu0 %v566, 126
        %v716 = vpop.permute.xlu0 %715
        %v719 = vsel %vm567, %v304, 0
        %721 = vmatprep.subr.mxu0 0.0
        %722 = vmatpush1.msra.mxu0 0.0
        %723 = vmatprep.subr.mxu0 0.0
        %724 = vmatpush1.msra.mxu0 0.0
        %725 = vmatprep.subr.mxu0 0.0
        %726 = vmatpush1.msra.mxu0 0.0
        %727 = vmatprep.subr.mxu0 0.0
        %728 = vmatpush1.msra.mxu0 0.0
        %729 = vmatprep.subr.mxu0 0.0
        %730 = vmatpush1.msra.mxu0 0.0
        %731 = vmatprep.subr.mxu0 0.0
        %732 = vmatpush1.msra.mxu0 0.0
        %733 = vmatprep.subr.mxu0 0.0
        %734 = vmatpush1.msra.mxu0 0.0
        %735 = vmatprep.subr.mxu0 0.0
        %736 = vmatpush1.msra.mxu0 0.0
        %737 = vmatprep.subr.mxu0 0.0
        %738 = vmatpush1.msra.mxu0 0.0
        %739 = vmatprep.subr.mxu0 0.0
        %740 = vmatpush1.msra.mxu0 0.0
        %741 = vmatprep.subr.mxu0 0.0
        %742 = vmatpush1.msra.mxu0 0.0
        %743 = vmatprep.subr.mxu0 0.0
        %744 = vmatpush1.msra.mxu0 0.0
        %745 = vmatprep.subr.mxu0 0.0
        %746 = vmatpush1.msra.mxu0 0.0
        %747 = vmatprep.subr.mxu0 0.0
        %748 = vmatpush1.msra.mxu0 0.0
        %749 = vmatprep.subr.mxu0 0.0
        %750 = vmatpush1.msra.mxu0 0.0
        %751 = vmatprep.subr.mxu0 0.0
        %752 = vmatpush1.msra.mxu0 %v716
        %753 = vmatprep.subr.mxu0 0.0
        %754 = vmatpush2.msra.mxu0 0.0
        %755 = vmatprep.subr.mxu0 0.0
        %756 = vmatpush2.msra.mxu0 0.0
        %757 = vmatprep.subr.mxu0 0.0
        %758 = vmatpush2.msra.mxu0 0.0
        %759 = vmatprep.subr.mxu0 0.0
        %760 = vmatpush2.msra.mxu0 0.0
        %761 = vmatprep.subr.mxu0 0.0
        %762 = vmatpush2.msra.mxu0 0.0
        %763 = vmatprep.subr.mxu0 0.0
        %764 = vmatpush2.msra.mxu0 0.0
        %765 = vmatprep.subr.mxu0 0.0
        %766 = vmatpush2.msra.mxu0 0.0
        %767 = vmatprep.subr.mxu0 0.0
        %768 = vmatpush2.msra.mxu0 0.0
        %769 = vmatprep.subr.mxu0 0.0
        %770 = vmatpush2.msra.mxu0 0.0
        %771 = vmatprep.subr.mxu0 0.0
        %772 = vmatpush2.msra.mxu0 0.0
        %773 = vmatprep.subr.mxu0 0.0
        %774 = vmatpush2.msra.mxu0 0.0
        %775 = vmatprep.subr.mxu0 0.0
        %776 = vmatpush2.msra.mxu0 0.0
        %777 = vmatprep.subr.mxu0 0.0
        %778 = vmatpush2.msra.mxu0 0.0
        %779 = vmatprep.subr.mxu0 0.0
        %780 = vmatpush2.msra.mxu0 0.0
        %781 = vmatprep.subr.mxu0 0.0
        %782 = vmatpush2.msra.mxu0 0.0
        %783 = vmatprep.subr.mxu0 0.0
        %784 = vmatpush2.msra.mxu0 0.0
        %785 = vmatprep.mubr.f32.mxu0 0.0
        %786 = vmatmul.mubr.f32.gmra.mxu0 %v719
        %v787 = vpop.f32.mrf.mxu0
        %v788 = vadd.f32 0.0, %v787
        %v789 = vpop.f32.mrf.mxu0
        %790 = vdwg.mxu0
        %v791 = vadd.f32 %v711, %v788
        %v792 = vld [vmem:[%s4] sm:$0xff]
        %794 = vset.pattern.permute.xlu0 0
        %795 = vperm.xlu0 %794, %v792
        %v796 = vpop.permute.xlu0 %795
        %v798 = vadd.f32 %v791, %v796
        %v799 = vmax.f32 %v798, 0.0
        %v800 = vld [vmem:[%s5] sm:$0xff]
        %v801 = vld [vmem:[%s6] sm:$0xff]
        %803 = vset.pattern.permute.xlu0 0
        %804 = vperm.xlu0 %803, %v801
        %v805 = vpop.permute.xlu0 %804
        %v808 = vsel %vm321, %v800, 0
        %810 = vmatprep.subr.mxu0 0.0
        %811 = vmatpush1.msra.mxu0 0.0
        %812 = vmatprep.subr.mxu0 0.0
        %813 = vmatpush1.msra.mxu0 0.0
        %814 = vmatprep.subr.mxu0 0.0
        %815 = vmatpush1.msra.mxu0 0.0
        %816 = vmatprep.subr.mxu0 0.0
        %817 = vmatpush1.msra.mxu0 0.0
        %818 = vmatprep.subr.mxu0 0.0
        %819 = vmatpush1.msra.mxu0 0.0
        %820 = vmatprep.subr.mxu0 0.0
        %821 = vmatpush1.msra.mxu0 0.0
        %822 = vmatprep.subr.mxu0 0.0
        %823 = vmatpush1.msra.mxu0 0.0
        %824 = vmatprep.subr.mxu0 0.0
        %825 = vmatpush1.msra.mxu0 0.0
        %826 = vmatprep.subr.mxu0 0.0
        %827 = vmatpush1.msra.mxu0 0.0
        %828 = vmatprep.subr.mxu0 0.0
        %829 = vmatpush1.msra.mxu0 0.0
        %830 = vmatprep.subr.mxu0 0.0
        %831 = vmatpush1.msra.mxu0 0.0
        %832 = vmatprep.subr.mxu0 0.0
        %833 = vmatpush1.msra.mxu0 0.0
        %834 = vmatprep.subr.mxu0 0.0
        %835 = vmatpush1.msra.mxu0 0.0
        %836 = vmatprep.subr.mxu0 0.0
        %837 = vmatpush1.msra.mxu0 0.0
        %838 = vmatprep.subr.mxu0 0.0
        %839 = vmatpush1.msra.mxu0 0.0
        %840 = vmatprep.subr.mxu0 0.0
        %841 = vmatpush1.msra.mxu0 %v402
        %842 = vmatprep.subr.mxu0 0.0
        %843 = vmatpush2.msra.mxu0 0.0
        %844 = vmatprep.subr.mxu0 0.0
        %845 = vmatpush2.msra.mxu0 0.0
        %846 = vmatprep.subr.mxu0 0.0
        %847 = vmatpush2.msra.mxu0 0.0
        %848 = vmatprep.subr.mxu0 0.0
        %849 = vmatpush2.msra.mxu0 0.0
        %850 = vmatprep.subr.mxu0 0.0
        %851 = vmatpush2.msra.mxu0 0.0
        %852 = vmatprep.subr.mxu0 0.0
        %853 = vmatpush2.msra.mxu0 0.0
        %854 = vmatprep.subr.mxu0 0.0
        %855 = vmatpush2.msra.mxu0 0.0
        %856 = vmatprep.subr.mxu0 0.0
        %857 = vmatpush2.msra.mxu0 0.0
        %858 = vmatprep.subr.mxu0 0.0
        %859 = vmatpush2.msra.mxu0 0.0
        %860 = vmatprep.subr.mxu0 0.0
        %861 = vmatpush2.msra.mxu0 0.0
        %862 = vmatprep.subr.mxu0 0.0
        %863 = vmatpush2.msra.mxu0 0.0
        %864 = vmatprep.subr.mxu0 0.0
        %865 = vmatpush2.msra.mxu0 0.0
        %866 = vmatprep.subr.mxu0 0.0
        %867 = vmatpush2.msra.mxu0 0.0
        %868 = vmatprep.subr.mxu0 0.0
        %869 = vmatpush2.msra.mxu0 0.0
        %870 = vmatprep.subr.mxu0 0.0
        %871 = vmatpush2.msra.mxu0 0.0
        %872 = vmatprep.subr.mxu0 0.0
        %873 = vmatpush2.msra.mxu0 0.0
        %874 = vmatprep.mubr.f32.mxu0 0.0
        %875 = vmatmul.mubr.f32.gmra.mxu0 %v808
        %v876 = vpop.f32.mrf.mxu0
        %v877 = vadd.f32 %v805, %v876
        %v878 = vpop.f32.mrf.mxu0
        %879 = vdwg.mxu0
        %v880 = vadd.f32 %v799, %v877
        %v881 = vmax.f32 %v880, 0.0
        %vm882 = vcmask 130048
        %883 = vst.msk [vmem:[%s291] sm:$0xff] %vm882, %v881
        %s884 = sand.u32 %s197, 1
        %s885 = scalar_lea.sflag [#allocation5], %s884
        %s886 = sand.u32 %s197, 1
        %s887 = smul.addr %s886, 8
        %s888 = scalar_lea.vmem [#allocation4], %s887
        // Predicated region
        $region53: #{tpu_custom_call.1} parent=47 // pred_check
          %p889 = pneg %p207
        $region54: #{tpu_custom_call.1} parent=47 // pred_check_branch
          %891 = sbr.rel (%p889) target = $region56
        $region55: #{tpu_custom_call.1} parent=47 // pred_region
          %s893 = ssub.s32 128, 128
          %894 = vsyncadd %s885, %s893
          %s895 = sadd.s32 %s26, %s25
          %s896 = smul.addr %s895, 128
          %s897 = scalar_lea.hbm %s7, %s896
          %s899 = sshll.u32 %s888, 4
          %s900 = int_to_ptr.vmem [resolvable:$true] %s899
          %902 = dma.vmem_to_hbm [thread:$0]  %s900, 128, %s897, %s885
        $region56: #{tpu_custom_call.1} parent=47 // pred_fallthru
          _
      $region48: #{tpu_custom_call.1} parent=5 // pred_fallthru
        _
      %p903 = scmp.le.s32.totalorder 2, %s16
      // Predicated region
      $region57: #{tpu_custom_call.1} parent=5 // pred_check
        %p904 = pneg %p903
      $region58: #{tpu_custom_call.1} parent=5 // pred_check_branch
        %906 = sbr.rel (%p904) target = $region60
      $region59: #{tpu_custom_call.1} parent=5 // pred_region
        %s907 = ssub.s32 %s16, 2
        // Predicated region
        $region61: #{tpu_custom_call.1} parent=59 // pred_check
          %p908 = pneg %p213
        $region62: #{tpu_custom_call.1} parent=59 // pred_check_branch
          %910 = sbr.rel (%p908) target = $region64
        $region63: #{tpu_custom_call.1} parent=59 // pred_region
          %s911 = sand.u32 %s198, 1
          %s912 = scalar_lea.sflag [#allocation5], %s911
          %s913 = sand.u32 %s198, 1
          %s914 = smul.addr %s913, 8
          %s915 = scalar_lea.vmem [#allocation4], %s914
          %916 = dma.done %s912, 128
        $region64: #{tpu_custom_call.1} parent=59 // pred_fallthru
          _
      $region60: #{tpu_custom_call.1} parent=5 // pred_fallthru
        _
    $region6: #{tpu_custom_call.1} parent=1 // loop_footer
      %s20 = sadd.s32 1, %s16
    $region7: #{tpu_custom_call.1} parent=1 // loop_footer_branch
      %15 = sbr.rel target = $region3
    $region8: #{tpu_custom_call.1} parent=1 // loop_exit
      _
    %917 = vsyncpa [#allocation5], 1
    %s918 = scalar_lea.sflag [#allocation5], 1
    %919 = vsyncpa %s918, 1

</llo_original>
